<compile_context>
chip_gen: v7x
topology: tpu7x:2x2x1
jax: 0.10.0
libtpu: 0.0.40
codegen_flags: <defaults>
</compile_context>

<pallas_src>
import random
import functools

import jax
import jax.numpy as jnp
from jax.experimental import pallas as pl
from jax.experimental.pallas import tpu as pltpu


DB_RANGE = (-7.5, 6.0)
N_BANDS = (2, 5)

# Keep one block comfortably small: 4 x (in + out, double-buffered) blocks of
# this size stays far below even v5e's 16 MiB scoped-VMEM default.
_MAX_BLOCK_BYTES = 2 * 1024 * 1024


def _pick_time_tile(F, T, itemsize):
    """Largest lane-dense (multiple-of-128) time tile that divides T and fits budget."""
    for tt in (2048, 1024, 512, 256, 128):
        if T % tt == 0 and F * tt * itemsize <= _MAX_BLOCK_BYTES:
            return tt
    # Fall back to the full time axis (always a legal block extent).
    return T


def _filter_augment_kernel(n_band, F, bounds_ref, factors_ref, audio_ref, out_ref):
    """One grid step == one (channel, time-tile) block.

    bounds_ref : SMEM int32 (n_band + 1,)  -- band boundary frequency indices (sorted)
    factors_ref: SMEM f32   (C, n_band)    -- linear gain per (channel, band)
    audio_ref  : VMEM       (F, TT)        -- this block of the spectrogram
    out_ref    : VMEM       (F, TT)
    """
    c = pl.program_id(0)

    # Per-frequency index column (F, 1); TPU iota must be >= 2D.
    freq_idx = jax.lax.broadcasted_iota(jnp.int32, (F, 1), 0)

    # Start at 1.0: frequencies not covered by the first n_band boundary
    # intervals keep unit gain (matches the PyTorch loop, which only touches
    # band_boundary_freqs[0 : n_band + 1]).
    scale = jnp.ones((F, 1), jnp.float32)
    for i in range(n_band):  # n_band is static (host-side random) -> unrolled
        lo = bounds_ref[i]
        hi = bounds_ref[i + 1]
        fac = factors_ref[c, i]
        mask = (freq_idx >= lo) & (freq_idx < hi)
        # Later bands overwrite earlier ones on overlap, same as the in-place
        # slice assignment in the PyTorch reference.
        scale = jnp.where(mask, fac, scale)

    out_ref[...] = (audio_ref[...].astype(jnp.float32) * scale).astype(out_ref.dtype)


def filter_augment_pallas(audio, bounds, factors):
    """audio: (C, F, T); bounds: (n_band+1,) int32 sorted; factors: (C, n_band) f32."""
    C, F, T = audio.shape
    n_band = factors.shape[1]
    itemsize = jnp.dtype(audio.dtype).itemsize

    TT = _pick_time_tile(F, T, itemsize)
    grid = (C, T // TT)

    kernel = functools.partial(_filter_augment_kernel, n_band, F)

    grid_spec = pltpu.PrefetchScalarGridSpec(
        num_scalar_prefetch=2,          # bounds + factors land in SMEM
        grid=grid,
        in_specs=[
            # (F, TT) block per grid step; channel dim squeezed out.
            pl.BlockSpec((None, F, TT), lambda c, t, bounds, factors: (c, 0, t)),
        ],
        out_specs=pl.BlockSpec((None, F, TT), lambda c, t, bounds, factors: (c, 0, t)),
    )

    cost = pl.CostEstimate(
        flops=C * F * T,
        transcendentals=0,
        bytes_accessed=2 * C * F * T * itemsize,
    )

    return pl.pallas_call(
        kernel,
        out_shape=jax.ShapeDtypeStruct((C, F, T), audio.dtype),
        grid_spec=grid_spec,
        # audio is the 3rd flat input (after the two scalar-prefetch args);
        # FilterAugment is semantically in-place, so alias it to the output.
        input_output_aliases={2: 0},
        compiler_params=pltpu.CompilerParams(
            dimension_semantics=("parallel", "parallel"),
            vmem_limit_bytes=32 * 1024 * 1024,
        ),
        cost_estimate=cost,
    )(bounds, factors, audio)


def filter_augment_reference(audio, bounds, factors):
    """Plain-JAX reference mirroring the PyTorch forward."""
    C, F, T = audio.shape
    n_band = factors.shape[1]
    freq = jnp.arange(F)
    filt = jnp.ones((C, F), jnp.float32)
    for i in range(n_band):
        mask = (freq >= bounds[i]) & (freq < bounds[i + 1])
        filt = jnp.where(mask[None, :], factors[:, i : i + 1], filt)
    return (audio.astype(jnp.float32) * filt[:, :, None]).astype(audio.dtype)


if __name__ == "__main__":
    # Deterministic parameter / randomness setup (synthetic, no checkpoint).
    random.seed(0)
    n_band = random.randint(N_BANDS[0], N_BANDS[1])  # host-side, like the module

    C, F, T = 4, 16, 1536  # small shapes; T multiple of 128 -> T-tiled grid
    key = jax.random.PRNGKey(0)
    k_audio, k_bnd, k_fac = jax.random.split(key, 3)

    audio = jax.random.normal(k_audio, (C, F, T), dtype=jnp.float32)

    # band_boundary_freqs = cat([0], sort(randint(1, F-1, (F-1,))), [F]);
    # only the first n_band + 1 entries are ever used by the forward loop.
    interior = jnp.sort(jax.random.randint(k_bnd, (F - 1,), 1, F - 1))
    full_bounds = jnp.concatenate(
        [jnp.array([0], jnp.int32), interior.astype(jnp.int32), jnp.array([F], jnp.int32)]
    )
    bounds = full_bounds[: n_band + 1]

    # band_factors = 10 ** ((uniform * (hi - lo) + lo) / 20), shape (C, n_band)
    factors_db = (
        jax.random.uniform(k_fac, (C, n_band), dtype=jnp.float32)
        * (DB_RANGE[1] - DB_RANGE[0])
        + DB_RANGE[0]
    )
    factors = jnp.power(10.0, factors_db / 20.0).astype(jnp.float32)

    # Compute the reference first (kernel output aliases the audio buffer).
    ref = filter_augment_reference(audio, bounds, factors)

    out = filter_augment_pallas(audio, bounds, factors)
    out = jax.block_until_ready(out)

    assert out.shape == (C, F, T) and out.dtype == jnp.float32
    assert jnp.allclose(out, ref, rtol=1e-6, atol=1e-6), "Pallas output != reference"

    print("KERNEL_OK")
</pallas_src>

<mosaic_0001>
module attributes {stable_mosaic.version = 11 : i64} {
  func.func @_filter_augment_kernel(%arg0: i32, %arg1: i32, %arg2: memref<6xi32, #tpu.memory_space<smem>>, %arg3: memref<4x5xf32, #tpu.memory_space<smem>>, %arg4: memref<1x16x512xf32, #tpu.memory_space<vmem>>, %arg5: memref<1x16x512xf32, #tpu.memory_space<vmem>>) attributes {dimension_semantics = [#tpu.dimension_semantics<parallel>, #tpu.dimension_semantics<parallel>], iteration_bounds = array<i64: 4, 3>, scalar_prefetch = 2 : i64, scratch_operands = 0 : i64, tpu.core_type = #tpu.core_type<tc>, window_params = [{transform_indices = @transform_0, window_bounds = array<i64: 1, 16, 512>}, {transform_indices = @transform_1, window_bounds = array<i64: 1, 16, 512>}]} {
    %0 = tpu.iota {dimensions = array<i32: 0>} : vector<16x1xi32>
    %cst = arith.constant 1.000000e+00 : f32
    %1 = vector.broadcast %cst : f32 to vector<16x1xf32>
    %c0 = arith.constant 0 : index
    %2 = memref.load %arg2[%c0] : memref<6xi32, #tpu.memory_space<smem>>
    %c1 = arith.constant 1 : index
    %3 = memref.load %arg2[%c1] : memref<6xi32, #tpu.memory_space<smem>>
    %4 = arith.index_cast %arg0 : i32 to index
    %c0_0 = arith.constant 0 : index
    %5 = memref.load %arg3[%4, %c0_0] : memref<4x5xf32, #tpu.memory_space<smem>>
    %6 = vector.broadcast %2 : i32 to vector<16x1xi32>
    %7 = arith.cmpi sge, %0, %6 : vector<16x1xi32>
    %8 = vector.broadcast %3 : i32 to vector<16x1xi32>
    %9 = arith.cmpi slt, %0, %8 : vector<16x1xi32>
    %10 = arith.andi %7, %9 : vector<16x1xi1>
    %11 = vector.broadcast %5 : f32 to vector<16x1xf32>
    %12 = arith.select %10, %11, %1 : vector<16x1xi1>, vector<16x1xf32>
    %c1_1 = arith.constant 1 : index
    %13 = memref.load %arg2[%c1_1] : memref<6xi32, #tpu.memory_space<smem>>
    %c2 = arith.constant 2 : index
    %14 = memref.load %arg2[%c2] : memref<6xi32, #tpu.memory_space<smem>>
    %15 = arith.index_cast %arg0 : i32 to index
    %c1_2 = arith.constant 1 : index
    %16 = memref.load %arg3[%15, %c1_2] : memref<4x5xf32, #tpu.memory_space<smem>>
    %17 = vector.broadcast %13 : i32 to vector<16x1xi32>
    %18 = arith.cmpi sge, %0, %17 : vector<16x1xi32>
    %19 = vector.broadcast %14 : i32 to vector<16x1xi32>
    %20 = arith.cmpi slt, %0, %19 : vector<16x1xi32>
    %21 = arith.andi %18, %20 : vector<16x1xi1>
    %22 = vector.broadcast %16 : f32 to vector<16x1xf32>
    %23 = arith.select %21, %22, %12 : vector<16x1xi1>, vector<16x1xf32>
    %c2_3 = arith.constant 2 : index
    %24 = memref.load %arg2[%c2_3] : memref<6xi32, #tpu.memory_space<smem>>
    %c3 = arith.constant 3 : index
    %25 = memref.load %arg2[%c3] : memref<6xi32, #tpu.memory_space<smem>>
    %26 = arith.index_cast %arg0 : i32 to index
    %c2_4 = arith.constant 2 : index
    %27 = memref.load %arg3[%26, %c2_4] : memref<4x5xf32, #tpu.memory_space<smem>>
    %28 = vector.broadcast %24 : i32 to vector<16x1xi32>
    %29 = arith.cmpi sge, %0, %28 : vector<16x1xi32>
    %30 = vector.broadcast %25 : i32 to vector<16x1xi32>
    %31 = arith.cmpi slt, %0, %30 : vector<16x1xi32>
    %32 = arith.andi %29, %31 : vector<16x1xi1>
    %33 = vector.broadcast %27 : f32 to vector<16x1xf32>
    %34 = arith.select %32, %33, %23 : vector<16x1xi1>, vector<16x1xf32>
    %c3_5 = arith.constant 3 : index
    %35 = memref.load %arg2[%c3_5] : memref<6xi32, #tpu.memory_space<smem>>
    %c4 = arith.constant 4 : index
    %36 = memref.load %arg2[%c4] : memref<6xi32, #tpu.memory_space<smem>>
    %37 = arith.index_cast %arg0 : i32 to index
    %c3_6 = arith.constant 3 : index
    %38 = memref.load %arg3[%37, %c3_6] : memref<4x5xf32, #tpu.memory_space<smem>>
    %39 = vector.broadcast %35 : i32 to vector<16x1xi32>
    %40 = arith.cmpi sge, %0, %39 : vector<16x1xi32>
    %41 = vector.broadcast %36 : i32 to vector<16x1xi32>
    %42 = arith.cmpi slt, %0, %41 : vector<16x1xi32>
    %43 = arith.andi %40, %42 : vector<16x1xi1>
    %44 = vector.broadcast %38 : f32 to vector<16x1xf32>
    %45 = arith.select %43, %44, %34 : vector<16x1xi1>, vector<16x1xf32>
    %c4_7 = arith.constant 4 : index
    %46 = memref.load %arg2[%c4_7] : memref<6xi32, #tpu.memory_space<smem>>
    %c5 = arith.constant 5 : index
    %47 = memref.load %arg2[%c5] : memref<6xi32, #tpu.memory_space<smem>>
    %48 = arith.index_cast %arg0 : i32 to index
    %c4_8 = arith.constant 4 : index
    %49 = memref.load %arg3[%48, %c4_8] : memref<4x5xf32, #tpu.memory_space<smem>>
    %50 = vector.broadcast %46 : i32 to vector<16x1xi32>
    %51 = arith.cmpi sge, %0, %50 : vector<16x1xi32>
    %52 = vector.broadcast %47 : i32 to vector<16x1xi32>
    %53 = arith.cmpi slt, %0, %52 : vector<16x1xi32>
    %54 = arith.andi %51, %53 : vector<16x1xi1>
    %55 = vector.broadcast %49 : f32 to vector<16x1xf32>
    %56 = arith.select %54, %55, %45 : vector<16x1xi1>, vector<16x1xf32>
    %c0_9 = arith.constant 0 : index
    %c0_10 = arith.constant 0 : index
    %c0_11 = arith.constant 0 : index
    %57 = vector.load %arg4[%c0_9, %c0_10, %c0_11] : memref<1x16x512xf32, #tpu.memory_space<vmem>>, vector<1x16x512xf32>
    %58 = vector.shape_cast %57 : vector<1x16x512xf32> to vector<16x512xf32>
    %59 = vector.broadcast %56 : vector<16x1xf32> to vector<16x512xf32>
    %60 = arith.mulf %58, %59 : vector<16x512xf32>
    %c0_12 = arith.constant 0 : index
    %c0_13 = arith.constant 0 : index
    %c0_14 = arith.constant 0 : index
    %61 = vector.load %arg5[%c0_12, %c0_13, %c0_14] : memref<1x16x512xf32, #tpu.memory_space<vmem>>, vector<1x16x512xf32>
    %62 = vector.shape_cast %61 : vector<1x16x512xf32> to vector<16x512xf32>
    %63 = vector.shape_cast %60 : vector<16x512xf32> to vector<1x16x512xf32>
    tpu.vector_store %arg5[%c0_12, %c0_13, %c0_14], %63 {strides = array<i32>} : memref<1x16x512xf32, #tpu.memory_space<vmem>>, vector<1x16x512xf32>,
    return
  }
  func.func @transform_0(%arg0: i32, %arg1: i32, %arg2: memref<6xi32, #tpu.memory_space<smem>>, %arg3: memref<4x5xf32, #tpu.memory_space<smem>>) -> (i32, i32, i32) {
    %c0_i32 = arith.constant 0 : i32
    %c0_i32_0 = arith.constant 0 : i32
    return %arg0, %c0_i32, %arg1 : i32, i32, i32
  }
  func.func @transform_1(%arg0: i32, %arg1: i32, %arg2: memref<6xi32, #tpu.memory_space<smem>>, %arg3: memref<4x5xf32, #tpu.memory_space<smem>>) -> (i32, i32, i32) {
    %c0_i32 = arith.constant 0 : i32
    %c0_i32_0 = arith.constant 0 : i32
    return %arg0, %c0_i32, %arg1 : i32, i32, i32
  }
}

</mosaic_0001>

<llo_original>
// kernel: tpu_custom_call.1
$region0: #{tpu_custom_call.1}
  #allocation0 [shape = 'u32[]', space=smem, size = 0x4, offset = 0x4, fixed_abs, tag = 'smem constant byte address 0x4 - core index']
  #allocation1 [shape = 'u32[144,128]{1,0:T(1,128)}', space=vmem, size = 0x12000, scoped, tag = 'internal scratch']
  #allocation2 [shape = 's32[1]{0}', space=sflag, size = 0x4, scoped, tag = 'scoped memory for tpu_custom_call.1']
  #allocation3 [shape = 'u8[512]{0}', space=smem, size = 0x200, scoped, tag = 'prefetched SMEM operand 0']
  #allocation4 [shape = 'u8[2048]{0}', space=smem, size = 0x800, scoped, tag = 'prefetched SMEM operand 1']
  %s0 = inlined_call_operand.vmem [shape: s32[6], index: 0, kind: input, shape index: {}]
  %s1 = inlined_call_operand.vmem [shape: f32[4,5], index: 1, kind: input, shape index: {}]
  %s2 = inlined_call_operand.hbm [shape: f32[4,16,1536], index: 2, kind: input, shape index: {}, may-alias: {2,3}]
  %s3 = inlined_call_operand.hbm [shape: f32[4,16,1536], index: 3, kind: output, shape index: {}, may-alias: {2,3}]
  %s4 = sld [smem:[#allocation0]]
  $region41: #{tpu_custom_call.1} parent=0
    _
  %s6 = ssub.s32 1, %s4
  %s7 = scalar_select 0, %s6, %s4
  %s8 = sshll.u32 %s0, 4
  %s9 = int_to_ptr.vmem [resolvable:$true] %s8
  %11 = dma.vmem_to_smem %s9, 16, [#allocation3], [#allocation2]
  %s12 = sshll.u32 %s1, 4
  %s13 = int_to_ptr.vmem [resolvable:$true] %s12
  %15 = dma.vmem_to_smem %s13, 64, [#allocation4], [#allocation2]
  %16 = dma.done [#allocation2], 80
  %17 = sfence
  $region1: #{tpu_custom_call.1} parent=0
    #allocation5 [shape = 'u8[65536]{0}', space=vmem, size = 0x10000, scoped, tag = 'input window, operand 2']
    #allocation6 [shape = 's32[2]{0}', space=sflag, size = 0x8, scoped, tag = 'scoped memory for tpu_custom_call.1']
    #allocation7 [shape = 's32[2]{0}', space=sflag, size = 0x8, scoped, tag = 'scoped memory for tpu_custom_call.1']
    #allocation8 [shape = 'u8[65536]{0}', space=vmem, size = 0x10000, scoped, tag = 'output window, operand 0']
    %18 = vsyncpa [#allocation6], 0
    %s19 = scalar_lea.sflag [#allocation6], 1
    %20 = vsyncpa %s19, 0
    %21 = vsyncpa [#allocation7], 0
    %s22 = scalar_lea.sflag [#allocation7], 1
    %23 = vsyncpa %s22, 0
    loop: start=0, step=1, limit=14
    $region2: #{tpu_custom_call.1} parent=1 // loop_pre_header
      _
    $region3: #{tpu_custom_call.1} parent=1 // loop_header
      %s25 = sphi 0, %s29
      %p26 = scmp.ge.s32.totalorder %s25, 14
      %s32 = sphi 0, %s44
      %s33 = sphi 0, %s40
      %s34 = sphi 0, %s32
      %s35 = sphi 0, %s33
      %s36 = sphi 0, %s34
      %s37 = sphi 0, %s35
      %s49 = sphi 0, %s51
      %s52 = sphi 0, %s49
      %s53 = sphi 0, %s52
      %s69 = sphi 0, %s53
      %s77 = sphi 0, %s79
      %s80 = sphi 0, %s77
      %s81 = sphi 0, %s80
      %s97 = sphi 0, %s81
    $region4: #{tpu_custom_call.1} parent=1 // loop_header_branch
      %28 = sbr.rel (%p26) target = $region8
    $region5: #{tpu_custom_call.1} parent=1 // loop_body
      %s30 = ssub.s32 %s25, 1
      %s31 = ssub.s32 %s25, 2
      %s38 = sadd.s32 1, %s33
      %p39 = scmp.ge.s32.totalorder %s38, 3
      %s40 = scalar_select %p39, 0, %s38
      %s41 = sadd.s32 1, %s32
      %s42 = scalar_select %p39, %s41, %s32
      %p43 = scmp.ge.s32.totalorder %s42, 4
      %s44 = scalar_select %p43, 0, %s42
      %s45 = ssub.s32 %s32, %s44
      %s46 = ssub.s32 %s33, %s40
      %s47 = sor.u32 %s45, %s46
      %p48 = scmp.eq.s32.totalorder %s47, 0
      %s50 = sadd.s32 %s49, 1
      %s51 = scalar_select %p48, %s49, %s50
      %p54 = pneg %p48
      %p55 = scmp.eq.s32.totalorder %s25, 11
      %p56 = por %p54, %p55
      %p57 = scmp.ne.s32.totalorder %s49, %s52
      %p58 = scmp.eq.s32.totalorder %s25, 0
      %p59 = por %p57, %p58
      %p60 = scmp.ne.s32.totalorder %s49, %s52
      %p61 = scmp.eq.s32.totalorder %s30, 11
      %p62 = por %p60, %p61
      %p63 = scmp.ne.s32.totalorder %s52, %s53
      %p64 = scmp.eq.s32.totalorder %s30, 0
      %p65 = por %p63, %p64
      %p66 = scmp.ne.s32.totalorder %s52, %s53
      %p67 = scmp.eq.s32.totalorder %s31, 11
      %p68 = por %p66, %p67
      %p70 = scmp.ne.s32.totalorder %s53, %s69
      %p71 = scmp.eq.s32.totalorder %s31, 0
      %p72 = por %p70, %p71
      %s73 = ssub.s32 %s32, %s44
      %s74 = ssub.s32 %s33, %s40
      %s75 = sor.u32 %s73, %s74
      %p76 = scmp.eq.s32.totalorder %s75, 0
      %s78 = sadd.s32 %s77, 1
      %s79 = scalar_select %p76, %s77, %s78
      %p82 = pneg %p76
      %p83 = scmp.eq.s32.totalorder %s25, 11
      %p84 = por %p82, %p83
      %p85 = scmp.ne.s32.totalorder %s77, %s80
      %p86 = scmp.eq.s32.totalorder %s25, 0
      %p87 = por %p85, %p86
      %p88 = scmp.ne.s32.totalorder %s77, %s80
      %p89 = scmp.eq.s32.totalorder %s30, 11
      %p90 = por %p88, %p89
      %p91 = scmp.ne.s32.totalorder %s80, %s81
      %p92 = scmp.eq.s32.totalorder %s30, 0
      %p93 = por %p91, %p92
      %p94 = scmp.ne.s32.totalorder %s80, %s81
      %p95 = scmp.eq.s32.totalorder %s31, 11
      %p96 = por %p94, %p95
      %p98 = scmp.ne.s32.totalorder %s81, %s97
      %p99 = scmp.eq.s32.totalorder %s31, 0
      %p100 = por %p98, %p99
      %p101 = scmp.le.s32.totalorder 1, %s25
      %p102 = scmp.lt.s32.totalorder %s25, 13
      %p103 = pnand %p101, %p102
      %p104 = pneg %p103
      // Predicated region
      $region9: #{tpu_custom_call.1} parent=5 // pred_check
        _
      $region10: #{tpu_custom_call.1} parent=5 // pred_check_branch
        %106 = sbr.rel (%p103) target = $region12
      $region11: #{tpu_custom_call.1} parent=5 // pred_region
        %s107 = ssub.s32 %s25, 1
      $region12: #{tpu_custom_call.1} parent=5 // pred_fallthru
        _
      %p108 = scmp.lt.s32.totalorder %s25, 12
      // Predicated region
      $region13: #{tpu_custom_call.1} parent=5 // pred_check
        %p109 = pneg %p108
      $region14: #{tpu_custom_call.1} parent=5 // pred_check_branch
        %111 = sbr.rel (%p109) target = $region16
      $region15: #{tpu_custom_call.1} parent=5 // pred_region
        // Predicated region
        $region17: #{tpu_custom_call.1} parent=15 // pred_check
          %p112 = pneg %p59
        $region18: #{tpu_custom_call.1} parent=15 // pred_check_branch
          %114 = sbr.rel (%p112) target = $region20
        $region19: #{tpu_custom_call.1} parent=15 // pred_region
          %s115 = sand.u32 %s49, 1
          %s116 = scalar_lea.sflag [#allocation6], %s115
          %s117 = sand.u32 %s49, 1
          %s118 = smul.addr %s117, 64
          %s119 = scalar_lea.vmem [#allocation5], %s118
          %s120 = smul.u32 4, %s33
          %s122 = ssub.s32 1024, 1024
          %123 = vsyncadd %s116, %s122
          %s124 = smul.addr %s32, 24
          %s125 = sadd.s32 %s120, %s124
          %s126 = smul.addr %s125, 128
          %s127 = scalar_lea.hbm %s2, %s126
          %s128 = sshll.u32 %s119, 4
          %s129 = int_to_ptr.vmem [resolvable:$true] %s128
          %134 = dma.hbm_to_vmem [thread:$0]  %s127, 1024, %s129, %s116, 1536, 512, 32
        $region20: #{tpu_custom_call.1} parent=15 // pred_fallthru
          _
      $region16: #{tpu_custom_call.1} parent=5 // pred_fallthru
        _
      %p135 = scmp.le.s32.totalorder 1, %s25
      %p136 = scmp.lt.s32.totalorder %s25, 13
      %p137 = pnand %p135, %p136
      %p138 = pneg %p137
      // Predicated region
      $region21: #{tpu_custom_call.1} parent=5 // pred_check
        _
      $region22: #{tpu_custom_call.1} parent=5 // pred_check_branch
        %140 = sbr.rel (%p137) target = $region24
      $region23: #{tpu_custom_call.1} parent=5 // pred_region
        %s141 = ssub.s32 %s25, 1
        %s142 = sand.u32 %s52, 1
        %s143 = scalar_lea.sflag [#allocation6], %s142
        %s144 = sand.u32 %s52, 1
        %s145 = smul.addr %s144, 64
        %s146 = scalar_lea.vmem [#allocation5], %s145
        // Predicated region
        $region25: #{tpu_custom_call.1} parent=23 // pred_check
          %p147 = pneg %p65
        $region26: #{tpu_custom_call.1} parent=23 // pred_check_branch
          %149 = sbr.rel (%p147) target = $region28
        $region27: #{tpu_custom_call.1} parent=23 // pred_region
          %150 = dma.done %s143, 1024
        $region28: #{tpu_custom_call.1} parent=23 // pred_fallthru
          _
        %s151 = sand.u32 %s52, 1
        %s152 = scalar_lea.sflag [#allocation6], %s151
        %s153 = sand.u32 %s52, 1
        %s154 = smul.addr %s153, 64
        %s155 = scalar_lea.vmem [#allocation5], %s154
        %p156 = pneg %p65
        %p157 = pneg %p62
        %p158 = pneg %p93
        %p159 = pneg %p90
        %s160 = sand.u32 %s80, 1
        %s161 = scalar_lea.sflag [#allocation7], %s160
        %s162 = sand.u32 %s80, 1
        %s163 = smul.addr %s162, 64
        %s164 = scalar_lea.vmem [#allocation8], %s163
        %s165 = smul.u32 4, %s35
        %s166 = smul.u32 4, %s35
        %v167 = vlaneseq
        %v168 = vshrl.u32 %v167, 7
        %v169 = vadd.s32 %v168, 8
        %s170 = sld [smem:[#allocation3]]
        %s171 = sld [smem:[#allocation3 + $0x1]]
        %s172 = smul.u32 %s34, 128
        %s173 = sld [smem:[#allocation4 + %s172]]
        %v174 = vstv %s170
        %vm175 = vcmp.ge.s32.totalorder %v168, %v174
        %vm176 = vcmp.ge.s32.totalorder %v169, %v174
        %v177 = vstv %s171
        %vm178 = vcmp.lt.s32.totalorder %v168, %v177
        %vm179 = vcmp.lt.s32.totalorder %v169, %v177
        %vm180 = vmand %vm175, %vm178
        %vm181 = vmand %vm176, %vm179
        %v182 = vstv %s173
        %v183 = vsel %vm180, %v182, 1.0
        %v184 = vsel %vm181, %v182, 1.0
        %s185 = sld [smem:[#allocation3 + $0x2]]
        %s186 = sadd.s32 %s172, 1
        %s187 = sld [smem:[#allocation4 + %s186]]
        %vm188 = vcmp.ge.s32.totalorder %v168, %v177
        %vm189 = vcmp.ge.s32.totalorder %v169, %v177
        %v190 = vstv %s185
        %vm191 = vcmp.lt.s32.totalorder %v168, %v190
        %vm192 = vcmp.lt.s32.totalorder %v169, %v190
        %vm193 = vmand %vm188, %vm191
        %vm194 = vmand %vm189, %vm192
        %v195 = vstv %s187
        %v196 = vsel %vm193, %v195, %v183
        %v197 = vsel %vm194, %v195, %v184
        %s198 = sld [smem:[#allocation3 + $0x3]]
        %s199 = sadd.s32 %s172, 2
        %s200 = sld [smem:[#allocation4 + %s199]]
        %vm201 = vcmp.ge.s32.totalorder %v168, %v190
        %vm202 = vcmp.ge.s32.totalorder %v169, %v190
        %v203 = vstv %s198
        %vm204 = vcmp.lt.s32.totalorder %v168, %v203
        %vm205 = vcmp.lt.s32.totalorder %v169, %v203
        %vm206 = vmand %vm201, %vm204
        %vm207 = vmand %vm202, %vm205
        %v208 = vstv %s200
        %v209 = vsel %vm206, %v208, %v196
        %v210 = vsel %vm207, %v208, %v197
        %s211 = sld [smem:[#allocation3 + $0x4]]
        %s212 = sadd.s32 %s172, 3
        %s213 = sld [smem:[#allocation4 + %s212]]
        %vm214 = vcmp.ge.s32.totalorder %v168, %v203
        %vm215 = vcmp.ge.s32.totalorder %v169, %v203
        %v216 = vstv %s211
        %vm217 = vcmp.lt.s32.totalorder %v168, %v216
        %vm218 = vcmp.lt.s32.totalorder %v169, %v216
        %vm219 = vmand %vm214, %vm217
        %vm220 = vmand %vm215, %vm218
        %v221 = vstv %s213
        %v222 = vsel %vm219, %v221, %v209
        %v223 = vsel %vm220, %v221, %v210
        %s224 = sld [smem:[#allocation3 + $0x5]]
        %s225 = sadd.s32 %s172, 4
        %s226 = sld [smem:[#allocation4 + %s225]]
        %vm227 = vcmp.ge.s32.totalorder %v168, %v216
        %vm228 = vcmp.ge.s32.totalorder %v169, %v216
        %v229 = vstv %s224
        %vm230 = vcmp.lt.s32.totalorder %v168, %v229
        %vm231 = vcmp.lt.s32.totalorder %v169, %v229
        %vm232 = vmand %vm227, %vm230
        %vm233 = vmand %vm228, %vm231
        %v234 = vstv %s226
        %v235 = vsel %vm232, %v234, %v222
        %v236 = vsel %vm233, %v234, %v223
        %v237 = vld [vmem:[%s146] sm:$0xff]
        %v238 = vld [vmem:[%s146 + $0x8] sm:$0xff]
        %v239 = vld [vmem:[%s146 + $0x10] sm:$0xff]
        %v240 = vld [vmem:[%s146 + $0x18] sm:$0xff]
        %v241 = vld [vmem:[%s146 + $0x20] sm:$0xff]
        %v242 = vld [vmem:[%s146 + $0x28] sm:$0xff]
        %v243 = vld [vmem:[%s146 + $0x30] sm:$0xff]
        %v244 = vld [vmem:[%s146 + $0x38] sm:$0xff]
        %v245 = vmul.f32 %v237, %v235
        %v246 = vmul.f32 %v238, %v235
        %v247 = vmul.f32 %v239, %v235
        %v248 = vmul.f32 %v240, %v235
        %v249 = vmul.f32 %v241, %v236
        %v250 = vmul.f32 %v242, %v236
        %v251 = vmul.f32 %v243, %v236
        %v252 = vmul.f32 %v244, %v236
        %253 = vst [vmem:[%s164] sm:$0xff] %v245
        %254 = vst [vmem:[%s164 + $0x8] sm:$0xff] %v246
        %255 = vst [vmem:[%s164 + $0x10] sm:$0xff] %v247
        %256 = vst [vmem:[%s164 + $0x18] sm:$0xff] %v248
        %257 = vst [vmem:[%s164 + $0x20] sm:$0xff] %v249
        %258 = vst [vmem:[%s164 + $0x28] sm:$0xff] %v250
        %259 = vst [vmem:[%s164 + $0x30] sm:$0xff] %v251
        %260 = vst [vmem:[%s164 + $0x38] sm:$0xff] %v252
        %s261 = sand.u32 %s80, 1
        %s262 = scalar_lea.sflag [#allocation7], %s261
        %s263 = sand.u32 %s80, 1
        %s264 = smul.addr %s263, 64
        %s265 = scalar_lea.vmem [#allocation8], %s264
        // Predicated region
        $region29: #{tpu_custom_call.1} parent=23 // pred_check
          %p266 = pneg %p90
        $region30: #{tpu_custom_call.1} parent=23 // pred_check_branch
          %268 = sbr.rel (%p266) target = $region32
        $region31: #{tpu_custom_call.1} parent=23 // pred_region
          %s269 = smul.u32 4, %s35
          %s271 = ssub.s32 1024, 1024
          %272 = vsyncadd %s262, %s271
          %s273 = smul.addr %s34, 24
          %s274 = sadd.s32 %s269, %s273
          %s275 = smul.addr %s274, 128
          %s276 = scalar_lea.hbm %s3, %s275
          %s277 = sshll.u32 %s265, 4
          %s278 = int_to_ptr.vmem [resolvable:$true] %s277
          %283 = dma.vmem_to_hbm [thread:$0]  %s278, 1024, %s276, %s262, 512, 1536, 32
        $region32: #{tpu_custom_call.1} parent=23 // pred_fallthru
          _
      $region24: #{tpu_custom_call.1} parent=5 // pred_fallthru
        _
      %p284 = scmp.le.s32.totalorder 2, %s25
      // Predicated region
      $region33: #{tpu_custom_call.1} parent=5 // pred_check
        %p285 = pneg %p284
      $region34: #{tpu_custom_call.1} parent=5 // pred_check_branch
        %287 = sbr.rel (%p285) target = $region36
      $region35: #{tpu_custom_call.1} parent=5 // pred_region
        %s288 = ssub.s32 %s25, 2
        // Predicated region
        $region37: #{tpu_custom_call.1} parent=35 // pred_check
          %p289 = pneg %p96
        $region38: #{tpu_custom_call.1} parent=35 // pred_check_branch
          %291 = sbr.rel (%p289) target = $region40
        $region39: #{tpu_custom_call.1} parent=35 // pred_region
          %s292 = sand.u32 %s81, 1
          %s293 = scalar_lea.sflag [#allocation7], %s292
          %s294 = sand.u32 %s81, 1
          %s295 = smul.addr %s294, 64
          %s296 = scalar_lea.vmem [#allocation8], %s295
          %297 = dma.done %s293, 1024
        $region40: #{tpu_custom_call.1} parent=35 // pred_fallthru
          _
      $region36: #{tpu_custom_call.1} parent=5 // pred_fallthru
        _
    $region6: #{tpu_custom_call.1} parent=1 // loop_footer
      %s29 = sadd.s32 1, %s25
    $region7: #{tpu_custom_call.1} parent=1 // loop_footer_branch
      %24 = sbr.rel target = $region3
    $region8: #{tpu_custom_call.1} parent=1 // loop_exit
      _
    %298 = vsyncpa [#allocation6], 1
    %s299 = scalar_lea.sflag [#allocation6], 1
    %300 = vsyncpa %s299, 1
    %301 = vsyncpa [#allocation7], 1
    %s302 = scalar_lea.sflag [#allocation7], 1
    %303 = vsyncpa %s302, 1

</llo_original>
